<compile_context>
chip_gen: v7x
topology: tpu7x:2x2x1
jax: 0.10.0
libtpu: 0.0.40
codegen_flags: <defaults>
</compile_context>

<pallas_src>
import functools

import jax
import jax.numpy as jnp
import numpy as np
from jax.experimental import pallas as pl
from jax.experimental.pallas import tpu as pltpu


# ------------------------- glue (plain JAX) -------------------------

def _round_up(x, m):
    return ((x + m - 1) // m) * m


def channel_shuffle_jax(x, groups):
    n, c, h, w = x.shape
    assert c % groups == 0
    x = x.reshape(n, groups, c // groups, h, w)
    x = jnp.transpose(x, (0, 2, 1, 3, 4))
    return x.reshape(n, c, h, w)


def im2col_rows(x, kh, kw, stride, padding):
    """(N, C, H, W) -> (N*OH*OW, C*KH*KW); rows ordered (n, oh, ow), cols (c, kh, kw)."""
    n, c, h, w = x.shape
    oh = (h + 2 * padding - kh) // stride + 1
    ow = (w + 2 * padding - kw) // stride + 1
    xp = jnp.pad(x, ((0, 0), (0, 0), (padding, padding), (padding, padding)))
    cols = []
    for i in range(kh):
        for j in range(kw):
            cols.append(xp[:, :, i:i + stride * (oh - 1) + 1:stride,
                              j:j + stride * (ow - 1) + 1:stride])   # (N, C, OH, OW)
    patches = jnp.stack(cols, axis=0)                  # (KK, N, C, OH, OW)
    patches = jnp.transpose(patches, (1, 3, 4, 2, 0))  # (N, OH, OW, C, KK)
    return patches.reshape(n * oh * ow, c * kh * kw), oh, ow


def _vmem_capacity_bytes():
    try:
        return int(pltpu.get_tpu_info().vmem_capacity_bytes)
    except Exception:
        return 64 << 20   # v7x-safe fallback


# ------------------------- Pallas kernel -------------------------

def _conv_gemm_stats_kernel(p_ref, w_ref, z_ref, stats_ref):
    """Per-M-tile GEMM; per-core-split running per-channel (sum, sum-of-squares).

    grid = (nsplit, tiles_per_split); axis 0 is "parallel" (megacore split),
    axis 1 is the sequential M-tile loop.  stats_ref is the (1, 2, Np) output
    block for this split — constant over axis 1, so it stays VMEM-resident and
    acts as the accumulator (init at inner step 0).
    """
    i = pl.program_id(1)

    @pl.when(i == 0)
    def _init():
        stats_ref[...] = jnp.zeros_like(stats_ref)

    z = jnp.dot(p_ref[...], w_ref[...], preferred_element_type=jnp.float32)  # (TM, Np)
    z_ref[...] = z

    s = jnp.sum(z, axis=0, keepdims=True)        # (1, Np)
    q = jnp.sum(z * z, axis=0, keepdims=True)    # (1, Np)
    stats_ref[...] += jnp.concatenate([s, q], axis=0).reshape(stats_ref.shape)


# ------------------------- wrapper -------------------------

def conv_bn_relu_pallas(x, weight, bias, gamma, beta, *,
                        stride, padding, groups,
                        channel_shuffle_flag, shuffle_groups,
                        first_relu, eps=1e-5, tm=None,
                        use_bf16_matmul=False):
    """Matches ConvBNReLU.forward (quant_type=0, BN in training mode)."""
    del bias  # cancelled exactly by the training-mode BN mean subtraction

    n, cin, h, w = x.shape
    cout, cin_g, kh, kw = weight.shape
    assert cin_g == cin // groups
    cout_g = cout // groups
    kg = cin_g * kh * kw
    kfull = groups * kg

    x = x.astype(jnp.float32)
    if first_relu:
        x = jnp.maximum(x, 0.0)          # before im2col: touch data once, not KH*KW times
    if channel_shuffle_flag:
        x = channel_shuffle_jax(x, shuffle_groups)

    p, oh, ow = im2col_rows(x, kh, kw, stride, padding)      # (M, Cin*KK)
    m = n * oh * ow

    # Grouped conv -> block-diagonal weight: (M, G*Kg) x (G*Kg, Cout).
    w2 = jnp.transpose(weight.reshape(groups, cout_g, kg), (0, 2, 1))   # (G, Kg, Cout_g)
    w_bd = jnp.einsum('gkc,gh->gkhc', w2,
                      jnp.eye(groups, dtype=w2.dtype)).reshape(kfull, cout)

    # Only the OUTPUT channel dim is padded (lane-dense stores); K keeps its true
    # size — the block covers the full K dim so the (8,128) rule is satisfied.
    np_ = max(128, _round_up(cout, 128))

    in_dtype = jnp.bfloat16 if use_bf16_matmul else jnp.float32
    esz_in = 2 if use_bf16_matmul else 4

    vmem_cap = _vmem_capacity_bytes()
    vmem_limit = min(vmem_cap * 3 // 4, 96 << 20)

    if tm is None:
        cap = 1024 if vmem_cap >= (96 << 20) else 512       # bigger tiles on 128 MiB chips
        tm = min(cap, _round_up(m, 8))
        budget = max(4 << 20, vmem_limit // 4)

        def _tile_bytes(t):
            return (2 * t * kfull * esz_in       # p tile, double-buffered
                    + 2 * t * np_ * 4            # z tile, double-buffered
                    + 2 * kfull * np_ * esz_in   # resident weights (count 2x for safety)
                    + 4 * np_ * 4)               # stats block

        while tm > 8 and _tile_bytes(tm) > budget:
            tm = _round_up(max(8, tm // 2), 8)
    tm = max(8, _round_up(int(tm), 8))

    n_tiles = -(-m // tm)
    nsplit = 2 if n_tiles >= 2 else 1            # split M tiles across the 2 v7x TCs
    tiles_per_split = -(-n_tiles // nsplit)
    mp = nsplit * tiles_per_split * tm

    p_pad = jnp.pad(p.astype(in_dtype), ((0, mp - m), (0, 0)))
    w_pad = jnp.pad(w_bd.astype(in_dtype), ((0, 0), (0, np_ - cout)))

    z, stats = pl.pallas_call(
        _conv_gemm_stats_kernel,
        out_shape=(jax.ShapeDtypeStruct((mp, np_), jnp.float32),
                   jax.ShapeDtypeStruct((nsplit, 2, np_), jnp.float32)),
        grid=(nsplit, tiles_per_split),
        in_specs=[
            pl.BlockSpec((tm, kfull), lambda c, i: (c * tiles_per_split + i, 0)),
            pl.BlockSpec((kfull, np_), lambda c, i: (0, 0)),     # weights, resident
        ],
        out_specs=(
            pl.BlockSpec((tm, np_), lambda c, i: (c * tiles_per_split + i, 0)),
            pl.BlockSpec((1, 2, np_), lambda c, i: (c, 0, 0)),   # per-split (sum, ssq)
        ),
        compiler_params=pltpu.CompilerParams(
            dimension_semantics=("parallel", "arbitrary"),
            vmem_limit_bytes=int(vmem_limit)),
    )(p_pad, w_pad)

    # --- epilogue (plain JAX: XLA fuses affine+ReLU into the slice/reshape/transpose) ---
    stats_tot = jnp.sum(stats, axis=0)                       # (2, Np)
    inv_m = jnp.float32(1.0 / m)                             # stats over the TRUE M only
    mean = stats_tot[0, :cout] * inv_m
    var = jnp.maximum(stats_tot[1, :cout] * inv_m - mean * mean, 0.0)   # biased var
    scale = gamma.astype(jnp.float32) * jax.lax.rsqrt(var + jnp.float32(eps))
    shift = beta.astype(jnp.float32) - mean * scale

    y = jnp.maximum(z[:m, :cout] * scale[None, :] + shift[None, :], 0.0)
    out = jnp.transpose(y.reshape(n, oh, ow, cout), (0, 3, 1, 2))
    return out


# ------------------------- reference (plain JAX) -------------------------

def ref_forward(x, weight, bias, gamma, beta, *, stride, padding, groups,
                channel_shuffle_flag, shuffle_groups, first_relu, eps=1e-5):
    if first_relu:
        x = jnp.maximum(x, 0.0)
    if channel_shuffle_flag:
        x = channel_shuffle_jax(x, shuffle_groups)
    z = jax.lax.conv_general_dilated(
        x, weight, window_strides=(stride, stride),
        padding=[(padding, padding), (padding, padding)],
        feature_group_count=groups,
        dimension_numbers=("NCHW", "OIHW", "NCHW"),
    ) + bias[None, :, None, None]
    mean = z.mean(axis=(0, 2, 3), keepdims=True)
    var = jnp.square(z - mean).mean(axis=(0, 2, 3), keepdims=True)
    y = (z - mean) * jax.lax.rsqrt(var + eps) * gamma[None, :, None, None] \
        + beta[None, :, None, None]
    return jnp.maximum(y, 0.0)


# ------------------------- main -------------------------

if __name__ == "__main__":
    # Module config (quant_type=0 path).
    N, CIN, COUT, H, W = 2, 4, 8, 16, 16
    KSIZE, STRIDE, PAD, GROUPS = 3, 1, 1, 2
    CH_SHUFFLE, SHUFFLE_GROUPS, FIRST_RELU = 1, 2, 1

    key = jax.random.PRNGKey(0)
    kx, kw, kb, kg, kbt = jax.random.split(key, 5)

    x = jax.random.normal(kx, (N, CIN, H, W), dtype=jnp.float32)
    weight = 0.1 * jax.random.normal(kw, (COUT, CIN // GROUPS, KSIZE, KSIZE),
                                     dtype=jnp.float32)
    bias = 0.1 * jax.random.normal(kb, (COUT,), dtype=jnp.float32)
    gamma = 1.0 + 0.1 * jax.random.normal(kg, (COUT,), dtype=jnp.float32)
    beta = 0.1 * jax.random.normal(kbt, (COUT,), dtype=jnp.float32)

    run = functools.partial(
        conv_bn_relu_pallas,
        stride=STRIDE, padding=PAD, groups=GROUPS,
        channel_shuffle_flag=CH_SHUFFLE, shuffle_groups=SHUFFLE_GROUPS,
        first_relu=FIRST_RELU,
        tm=128)   # force multiple M tiles (M = 512) to exercise split + tiled-BN path

    out = jax.block_until_ready(jax.jit(run)(x, weight, bias, gamma, beta))

    ref = ref_forward(x, weight, bias, gamma, beta,
                      stride=STRIDE, padding=PAD, groups=GROUPS,
                      channel_shuffle_flag=CH_SHUFFLE,
                      shuffle_groups=SHUFFLE_GROUPS, first_relu=FIRST_RELU)

    np.testing.assert_allclose(np.asarray(out), np.asarray(ref),
                               rtol=1e-4, atol=1e-4)
    print("KERNEL_OK")
</pallas_src>

<mosaic_0001>
module attributes {stable_mosaic.version = 11 : i64} {
  func.func @_conv_gemm_stats_kernel(%arg0: i32, %arg1: i32, %arg2: memref<128x36xf32, #tpu.memory_space<vmem>>, %arg3: memref<36x128xf32, #tpu.memory_space<vmem>>, %arg4: memref<128x128xf32, #tpu.memory_space<vmem>>, %arg5: memref<1x2x128xf32, #tpu.memory_space<vmem>>) attributes {dimension_semantics = [#tpu.dimension_semantics<parallel>, #tpu.dimension_semantics<arbitrary>], iteration_bounds = array<i64: 2, 2>, scalar_prefetch = 0 : i64, scratch_operands = 0 : i64, tpu.core_type = #tpu.core_type<tc>, window_params = [{transform_indices = @transform_0, window_bounds = array<i64: 128, 36>}, {pipeline_mode = #tpu.pipeline_mode<synchronous>, transform_indices = @transform_1, window_bounds = array<i64: 36, 128>}, {transform_indices = @transform_2, window_bounds = array<i64: 128, 128>}, {transform_indices = @transform_3, window_bounds = array<i64: 1, 2, 128>}]} {
    %c0_i32 = arith.constant 0 : i32
    %0 = arith.cmpi eq, %arg1, %c0_i32 : i32
    %1 = arith.extui %0 : i1 to i32
    %c0_i32_0 = arith.constant 0 : i32
    %2 = arith.cmpi ne, %1, %c0_i32_0 : i32
    scf.if %2 {
      %cst_14 = arith.constant 0.000000e+00 : f32
      %17 = vector.broadcast %cst_14 : f32 to vector<1x2x128xf32>
      %c0_15 = arith.constant 0 : index
      %c0_16 = arith.constant 0 : index
      %c0_17 = arith.constant 0 : index
      %18 = vector.load %arg5[%c0_15, %c0_16, %c0_17] : memref<1x2x128xf32, #tpu.memory_space<vmem>>, vector<1x2x128xf32>
      tpu.vector_store %arg5[%c0_15, %c0_16, %c0_17], %17 {strides = array<i32>} : memref<1x2x128xf32, #tpu.memory_space<vmem>>, vector<1x2x128xf32>,
    } else {
    }
    %c0 = arith.constant 0 : index
    %c0_1 = arith.constant 0 : index
    %3 = vector.load %arg2[%c0, %c0_1] : memref<128x36xf32, #tpu.memory_space<vmem>>, vector<128x36xf32>
    %c0_2 = arith.constant 0 : index
    %c0_3 = arith.constant 0 : index
    %4 = vector.load %arg3[%c0_2, %c0_3] : memref<36x128xf32, #tpu.memory_space<vmem>>, vector<36x128xf32>
    %cst = arith.constant dense<0.000000e+00> : vector<128x128xf32>
    %5 = tpu.matmul %3, %4, %cst {dimension_numbers = #tpu.dot_dimension_numbers<[1], [0], [0], [1], [0, 0, 1, 1], [], []>} : vector<128x36xf32>, vector<36x128xf32>, vector<128x128xf32> -> vector<128x128xf32>
    %c0_4 = arith.constant 0 : index
    %c0_5 = arith.constant 0 : index
    %6 = vector.load %arg4[%c0_4, %c0_5] : memref<128x128xf32, #tpu.memory_space<vmem>>, vector<128x128xf32>
    tpu.vector_store %arg4[%c0_4, %c0_5], %5 {strides = array<i32>} : memref<128x128xf32, #tpu.memory_space<vmem>>, vector<128x128xf32>,
    %cst_6 = arith.constant dense<0.000000e+00> : vector<128xf32>
    %7 = vector.multi_reduction <add>, %5, %cst_6 [0] : vector<128x128xf32> to vector<128xf32>
    %8 = vector.shape_cast %7 : vector<128xf32> to vector<1x128xf32>
    %9 = arith.mulf %5, %5 : vector<128x128xf32>
    %cst_7 = arith.constant dense<0.000000e+00> : vector<128xf32>
    %10 = vector.multi_reduction <add>, %9, %cst_7 [0] : vector<128x128xf32> to vector<128xf32>
    %11 = vector.shape_cast %10 : vector<128xf32> to vector<1x128xf32>
    %c0_8 = arith.constant 0 : index
    %c0_9 = arith.constant 0 : index
    %c0_10 = arith.constant 0 : index
    %12 = vector.load %arg5[%c0_8, %c0_9, %c0_10] : memref<1x2x128xf32, #tpu.memory_space<vmem>>, vector<1x2x128xf32>
    %13 = tpu.concatenate %8, %11 in 0 : vector<1x128xf32>, vector<1x128xf32> -> vector<2x128xf32>
    %14 = vector.shape_cast %13 : vector<2x128xf32> to vector<1x2x128xf32>
    %15 = arith.addf %12, %14 : vector<1x2x128xf32>
    %c0_11 = arith.constant 0 : index
    %c0_12 = arith.constant 0 : index
    %c0_13 = arith.constant 0 : index
    %16 = vector.load %arg5[%c0_11, %c0_12, %c0_13] : memref<1x2x128xf32, #tpu.memory_space<vmem>>, vector<1x2x128xf32>
    tpu.vector_store %arg5[%c0_11, %c0_12, %c0_13], %15 {strides = array<i32>} : memref<1x2x128xf32, #tpu.memory_space<vmem>>, vector<1x2x128xf32>,
    return
  }
  func.func @transform_0(%arg0: i32, %arg1: i32) -> (i32, i32) {
    %c2_i32 = arith.constant 2 : i32
    %0 = arith.muli %arg0, %c2_i32 : i32
    %1 = arith.addi %0, %arg1 : i32
    %c0_i32 = arith.constant 0 : i32
    %c0_i32_0 = arith.constant 0 : i32
    return %1, %c0_i32 : i32, i32
  }
  func.func @transform_1(%arg0: i32, %arg1: i32) -> (i32, i32) {
    %c0_i32 = arith.constant 0 : i32
    %c0_i32_0 = arith.constant 0 : i32
    %c0_i32_1 = arith.constant 0 : i32
    return %c0_i32, %c0_i32_0 : i32, i32
  }
  func.func @transform_2(%arg0: i32, %arg1: i32) -> (i32, i32) {
    %c2_i32 = arith.constant 2 : i32
    %0 = arith.muli %arg0, %c2_i32 : i32
    %1 = arith.addi %0, %arg1 : i32
    %c0_i32 = arith.constant 0 : i32
    %c0_i32_0 = arith.constant 0 : i32
    return %1, %c0_i32 : i32, i32
  }
  func.func @transform_3(%arg0: i32, %arg1: i32) -> (i32, i32, i32) {
    %c0_i32 = arith.constant 0 : i32
    %c0_i32_0 = arith.constant 0 : i32
    %c0_i32_1 = arith.constant 0 : i32
    return %arg0, %c0_i32, %c0_i32_0 : i32, i32, i32
  }
}

</mosaic_0001>

<llo_original>
// kernel: conv_bn_relu_pallas.1
$region0: #{conv_bn_relu_pallas.1}
  #allocation0 [shape = 'u32[]', space=smem, size = 0x4, offset = 0x4, fixed_abs, tag = 'smem constant byte address 0x4 - core index']
  #allocation1 [shape = 'u32[144,128]{1,0:T(1,128)}', space=vmem, size = 0x12000, scoped, tag = 'internal scratch']
  %s0 = inlined_call_operand.vmem [shape: f32[512,36], index: 0, kind: input, shape index: {}]
  %s1 = inlined_call_operand.vmem [shape: f32[36,128], index: 1, kind: input, shape index: {}]
  %s2 = inlined_call_operand.vmem [shape: f32[512,128], index: 2, kind: output, shape index: {0}]
  %s3 = inlined_call_operand.vmem [shape: f32[2,2,128], index: 3, kind: output, shape index: {1}]
  %4 = xla_tuple %s2, %s3
  %s5 = sld [smem:[#allocation0]]
  $region53: #{conv_bn_relu_pallas.1} parent=0
    _
  %s7 = ssub.s32 1, %s5
  %s8 = scalar_select 0, %s7, %s5
  loop: start=0, step=1, limit=6
  $region2: #{conv_bn_relu_pallas.1} parent=0 // loop_pre_header
    _
  $region3: #{conv_bn_relu_pallas.1} parent=0 // loop_header
    %s10 = sphi 0, %s14
    %p11 = scmp.ge.s32.totalorder %s10, 6
    %s17 = sphi 0, %s29
    %s18 = sphi 0, %s25
    %s19 = sphi 0, %s17
    %s20 = sphi 0, %s18
    %s21 = sphi 0, %s19
    %s22 = sphi 0, %s20
    %s36 = sphi 0, %s38
    %s39 = sphi 0, %s36
    %s40 = sphi 0, %s39
    %s56 = sphi 0, %s40
    %s60 = sphi 0, %s60
    %s62 = sphi 0, %s60
    %s63 = sphi 0, %s62
    %s77 = sphi 0, %s63
    %s87 = sphi 0, %s89
    %s90 = sphi 0, %s87
    %s91 = sphi 0, %s90
    %s107 = sphi 0, %s91
    %s113 = sphi 0, %s115
    %s116 = sphi 0, %s113
    %s117 = sphi 0, %s116
    %s133 = sphi 0, %s117
  $region4: #{conv_bn_relu_pallas.1} parent=0 // loop_header_branch
    %13 = sbr.rel (%p11) target = $region8
  $region5: #{conv_bn_relu_pallas.1} parent=0 // loop_body
    %s15 = ssub.s32 %s10, 1
    %s16 = ssub.s32 %s10, 2
    %s23 = sadd.s32 1, %s18
    %p24 = scmp.ge.s32.totalorder %s23, 2
    %s25 = scalar_select %p24, 0, %s23
    %s26 = sadd.s32 1, %s17
    %s27 = scalar_select %p24, %s26, %s17
    %p28 = scmp.ge.s32.totalorder %s27, 2
    %s29 = scalar_select %p28, 0, %s27
    %s30 = smul.u32 %s17, 2
    %s31 = sadd.s32 %s30, %s18
    %s32 = smul.u32 %s29, 2
    %s33 = sadd.s32 %s32, %s25
    %s34 = ssub.s32 %s31, %s33
    %p35 = scmp.eq.s32.totalorder %s34, 0
    %s37 = sadd.s32 %s36, 1
    %s38 = scalar_select %p35, %s36, %s37
    %p41 = pneg %p35
    %p42 = scmp.eq.s32.totalorder %s10, 3
    %p43 = por %p41, %p42
    %p44 = scmp.ne.s32.totalorder %s36, %s39
    %p45 = scmp.eq.s32.totalorder %s10, 0
    %p46 = por %p44, %p45
    %p47 = scmp.ne.s32.totalorder %s36, %s39
    %p48 = scmp.eq.s32.totalorder %s15, 3
    %p49 = por %p47, %p48
    %p50 = scmp.ne.s32.totalorder %s39, %s40
    %p51 = scmp.eq.s32.totalorder %s15, 0
    %p52 = por %p50, %p51
    %p53 = scmp.ne.s32.totalorder %s39, %s40
    %p54 = scmp.eq.s32.totalorder %s16, 3
    %p55 = por %p53, %p54
    %p57 = scmp.ne.s32.totalorder %s40, %s56
    %p58 = scmp.eq.s32.totalorder %s16, 0
    %p59 = por %p57, %p58
    %s61 = sadd.s32 %s60, 1
    %p64 = scmp.eq.s32.totalorder %s10, 3
    %p65 = scmp.ne.s32.totalorder %s60, %s62
    %p66 = scmp.eq.s32.totalorder %s10, 0
    %p67 = por %p65, %p66
    %p68 = scmp.ne.s32.totalorder %s60, %s62
    %p69 = scmp.eq.s32.totalorder %s15, 3
    %p70 = por %p68, %p69
    %p71 = scmp.ne.s32.totalorder %s62, %s63
    %p72 = scmp.eq.s32.totalorder %s15, 0
    %p73 = por %p71, %p72
    %p74 = scmp.ne.s32.totalorder %s62, %s63
    %p75 = scmp.eq.s32.totalorder %s16, 3
    %p76 = por %p74, %p75
    %p78 = scmp.ne.s32.totalorder %s63, %s77
    %p79 = scmp.eq.s32.totalorder %s16, 0
    %p80 = por %p78, %p79
    %s81 = smul.u32 %s17, 2
    %s82 = sadd.s32 %s81, %s18
    %s83 = smul.u32 %s29, 2
    %s84 = sadd.s32 %s83, %s25
    %s85 = ssub.s32 %s82, %s84
    %p86 = scmp.eq.s32.totalorder %s85, 0
    %s88 = sadd.s32 %s87, 1
    %s89 = scalar_select %p86, %s87, %s88
    %p92 = pneg %p86
    %p93 = scmp.eq.s32.totalorder %s10, 3
    %p94 = por %p92, %p93
    %p95 = scmp.ne.s32.totalorder %s87, %s90
    %p96 = scmp.eq.s32.totalorder %s10, 0
    %p97 = por %p95, %p96
    %p98 = scmp.ne.s32.totalorder %s87, %s90
    %p99 = scmp.eq.s32.totalorder %s15, 3
    %p100 = por %p98, %p99
    %p101 = scmp.ne.s32.totalorder %s90, %s91
    %p102 = scmp.eq.s32.totalorder %s15, 0
    %p103 = por %p101, %p102
    %p104 = scmp.ne.s32.totalorder %s90, %s91
    %p105 = scmp.eq.s32.totalorder %s16, 3
    %p106 = por %p104, %p105
    %p108 = scmp.ne.s32.totalorder %s91, %s107
    %p109 = scmp.eq.s32.totalorder %s16, 0
    %p110 = por %p108, %p109
    %s111 = ssub.s32 %s17, %s29
    %p112 = scmp.eq.s32.totalorder %s111, 0
    %s114 = sadd.s32 %s113, 1
    %s115 = scalar_select %p112, %s113, %s114
    %p118 = pneg %p112
    %p119 = scmp.eq.s32.totalorder %s10, 3
    %p120 = por %p118, %p119
    %p121 = scmp.ne.s32.totalorder %s113, %s116
    %p122 = scmp.eq.s32.totalorder %s10, 0
    %p123 = por %p121, %p122
    %p124 = scmp.ne.s32.totalorder %s113, %s116
    %p125 = scmp.eq.s32.totalorder %s15, 3
    %p126 = por %p124, %p125
    %p127 = scmp.ne.s32.totalorder %s116, %s117
    %p128 = scmp.eq.s32.totalorder %s15, 0
    %p129 = por %p127, %p128
    %p130 = scmp.ne.s32.totalorder %s116, %s117
    %p131 = scmp.eq.s32.totalorder %s16, 3
    %p132 = por %p130, %p131
    %p134 = scmp.ne.s32.totalorder %s117, %s133
    %p135 = scmp.eq.s32.totalorder %s16, 0
    %p136 = por %p134, %p135
    %p137 = scmp.le.s32.totalorder 1, %s10
    %p138 = scmp.lt.s32.totalorder %s10, 5
    %p139 = pnand %p137, %p138
    %p140 = pneg %p139
    // Predicated region
    $region9: #{conv_bn_relu_pallas.1} parent=5 // pred_check
      _
    $region10: #{conv_bn_relu_pallas.1} parent=5 // pred_check_branch
      %142 = sbr.rel (%p139) target = $region12
    $region11: #{conv_bn_relu_pallas.1} parent=5 // pred_region
      %s143 = ssub.s32 %s10, 1
      // Predicated region
      $region13: #{conv_bn_relu_pallas.1} parent=11 // pred_check
        %p144 = pneg %p73
      $region14: #{conv_bn_relu_pallas.1} parent=11 // pred_check_branch
        %146 = sbr.rel (%p144) target = $region16
      $region15: #{conv_bn_relu_pallas.1} parent=11 // pred_region
        _
      $region16: #{conv_bn_relu_pallas.1} parent=11 // pred_fallthru
        _
    $region12: #{conv_bn_relu_pallas.1} parent=5 // pred_fallthru
      _
    %p147 = scmp.lt.s32.totalorder %s10, 4
    // Predicated region
    $region17: #{conv_bn_relu_pallas.1} parent=5 // pred_check
      %p148 = pneg %p147
    $region18: #{conv_bn_relu_pallas.1} parent=5 // pred_check_branch
      %150 = sbr.rel (%p148) target = $region20
    $region19: #{conv_bn_relu_pallas.1} parent=5 // pred_region
      // Predicated region
      $region21: #{conv_bn_relu_pallas.1} parent=19 // pred_check
        %p151 = pneg %p46
      $region22: #{conv_bn_relu_pallas.1} parent=19 // pred_check_branch
        %153 = sbr.rel (%p151) target = $region24
      $region23: #{conv_bn_relu_pallas.1} parent=19 // pred_region
        %s154 = smul.u32 %s17, 2
        %s155 = sadd.s32 %s154, %s18
        %s156 = smul.u32 16, %s155
        %p157 = scmp.lt.s32.totalorder %s156, 63
        %s158 = scalar_select %p157, %s156, 63
        %s159 = smul.addr %s158, 8
        %s160 = scalar_lea.vmem %s0, %s159
        %s161 = smul.u32 %s17, 2
        %s162 = sadd.s32 %s161, %s18
        %s163 = smul.u32 16, %s162
      $region24: #{conv_bn_relu_pallas.1} parent=19 // pred_fallthru
        _
    $region20: #{conv_bn_relu_pallas.1} parent=5 // pred_fallthru
      _
    %p164 = scmp.le.s32.totalorder 1, %s10
    %p165 = scmp.lt.s32.totalorder %s10, 5
    %p166 = pnand %p164, %p165
    %p167 = pneg %p166
    // Predicated region
    $region25: #{conv_bn_relu_pallas.1} parent=5 // pred_check
      _
    $region26: #{conv_bn_relu_pallas.1} parent=5 // pred_check_branch
      %169 = sbr.rel (%p166) target = $region28
    $region27: #{conv_bn_relu_pallas.1} parent=5 // pred_region
      %s170 = ssub.s32 %s10, 1
      %s171 = smul.u32 %s19, 2
      %s172 = sadd.s32 %s171, %s20
      %s173 = smul.u32 16, %s172
      %p174 = scmp.lt.s32.totalorder %s173, 63
      %s175 = scalar_select %p174, %s173, 63
      %s176 = smul.addr %s175, 8
      %s177 = scalar_lea.vmem %s0, %s176
      %p178 = pneg %p52
      %p179 = pneg %p49
      %p180 = pneg %p73
      %p181 = pneg %p70
      %p182 = pneg %p103
      %p183 = pneg %p100
      %s184 = smul.u32 %s19, 2
      %s185 = sadd.s32 %s184, %s20
      %s186 = smul.u32 16, %s185
      %p187 = scmp.lt.s32.totalorder %s186, 63
      %s188 = scalar_select %p187, %s186, 63
      %s189 = smul.addr %s188, 8
      %s190 = scalar_lea.vmem %s2, %s189
      %p191 = pneg %p129
      %p192 = pneg %p126
      %p193 = scmp.lt.s32.totalorder %s19, 1
      %s194 = scalar_select %p193, %s19, 1
      %s195 = smul.addr %s194, 2
      %s196 = scalar_lea.vmem %s3, %s195
      %s197 = smul.u32 %s19, 2
      %s198 = sadd.s32 %s197, %s20
      %s199 = smul.u32 16, %s198
      %p200 = scmp.lt.s32.totalorder %s199, 63
      %s201 = scalar_select %p200, %s199, 63
      %s202 = smul.addr %s201, 8
      %s203 = scalar_lea.vmem %s0, %s202
      %s204 = smul.u32 %s19, 2
      %s205 = sadd.s32 %s204, %s20
      %s206 = smul.u32 16, %s205
      %s207 = smul.u32 %s19, 2
      %s208 = sadd.s32 %s207, %s20
      %s209 = smul.u32 16, %s208
      %p210 = scmp.lt.s32.totalorder %s209, 63
      %s211 = scalar_select %p210, %s209, 63
      %s212 = smul.addr %s211, 8
      %s213 = scalar_lea.vmem %s2, %s212
      %s214 = smul.u32 %s19, 2
      %s215 = sadd.s32 %s214, %s20
      %s216 = smul.u32 16, %s215
      %p217 = scmp.lt.s32.totalorder %s19, 1
      %s218 = scalar_select %p217, %s19, 1
      %s219 = smul.addr %s218, 2
      %s220 = scalar_lea.vmem %s3, %s219
      %p221 = scmp.eq.s32.totalorder %s20, 0
      // Predicated region
      $region29: #{conv_bn_relu_pallas.1} parent=27 // pred_check
        %p222 = pneg %p221
      $region30: #{conv_bn_relu_pallas.1} parent=27 // pred_check_branch
        %224 = sbr.rel (%p222) target = $region32
      $region31: #{conv_bn_relu_pallas.1} parent=27 // pred_region
        %225 = vst [vmem:[%s220] sm:$0x3] 0.0
      $region32: #{conv_bn_relu_pallas.1} parent=27 // pred_fallthru
        _
      %v226 = vld [vmem:[%s203] sm:$0xff]
      %v227 = vld [vmem:[%s203 + $0x8] sm:$0xff]
      %v228 = vld [vmem:[%s203 + $0x10] sm:$0xff]
      %v229 = vld [vmem:[%s203 + $0x18] sm:$0xff]
      %v230 = vld [vmem:[%s203 + $0x20] sm:$0xff]
      %v231 = vld [vmem:[%s203 + $0x28] sm:$0xff]
      %v232 = vld [vmem:[%s203 + $0x30] sm:$0xff]
      %v233 = vld [vmem:[%s203 + $0x38] sm:$0xff]
      %v234 = vld [vmem:[%s203 + $0x40] sm:$0xff]
      %v235 = vld [vmem:[%s203 + $0x48] sm:$0xff]
      %v236 = vld [vmem:[%s203 + $0x50] sm:$0xff]
      %v237 = vld [vmem:[%s203 + $0x58] sm:$0xff]
      %v238 = vld [vmem:[%s203 + $0x60] sm:$0xff]
      %v239 = vld [vmem:[%s203 + $0x68] sm:$0xff]
      %v240 = vld [vmem:[%s203 + $0x70] sm:$0xff]
      %v241 = vld [vmem:[%s203 + $0x78] sm:$0xff]
      %v242 = vld [vmem:[%s1] sm:$0xff]
      %v243 = vld [vmem:[%s1 + $0x8] sm:$0xff]
      %v244 = vld [vmem:[%s1 + $0x10] sm:$0xff]
      %v245 = vld [vmem:[%s1 + $0x18] sm:$0xff]
      %v246 = vld [vmem:[%s1 + $0x20] sm:$0xf]
      %vm247 = vcmask 293888
      %v249 = vsel %vm247, %v226, 0
      %v252 = vsel %vm247, %v227, 0
      %v255 = vsel %vm247, %v228, 0
      %v258 = vsel %vm247, %v229, 0
      %v261 = vsel %vm247, %v230, 0
      %v264 = vsel %vm247, %v231, 0
      %v267 = vsel %vm247, %v232, 0
      %v270 = vsel %vm247, %v233, 0
      %v273 = vsel %vm247, %v234, 0
      %v276 = vsel %vm247, %v235, 0
      %v279 = vsel %vm247, %v236, 0
      %v282 = vsel %vm247, %v237, 0
      %v285 = vsel %vm247, %v238, 0
      %v288 = vsel %vm247, %v239, 0
      %v291 = vsel %vm247, %v240, 0
      %v294 = vsel %vm247, %v241, 0
      %vm296 = vcmask 1043456
      %v298 = vsel %vm296, %v246, 0
      %300 = vmatprep.subr.mxu0 0.0
      %301 = vmatpush1.msra.mxu0 %v242
      %302 = vmatprep.subr.mxu0 0.0
      %303 = vmatpush1.msra.mxu0 %v243
      %304 = vmatprep.subr.mxu0 0.0
      %305 = vmatpush1.msra.mxu0 %v244
      %306 = vmatprep.subr.mxu0 0.0
      %307 = vmatpush1.msra.mxu0 %v245
      %308 = vmatprep.subr.mxu0 0.0
      %309 = vmatpush1.msra.mxu0 %v298
      %310 = vmatprep.subr.mxu0 0.0
      %311 = vmatpush1.msra.mxu0 0.0
      %312 = vmatprep.subr.mxu0 0.0
      %313 = vmatpush1.msra.mxu0 0.0
      %314 = vmatprep.subr.mxu0 0.0
      %315 = vmatpush1.msra.mxu0 0.0
      %316 = vmatprep.subr.mxu0 0.0
      %317 = vmatpush1.msra.mxu0 0.0
      %318 = vmatprep.subr.mxu0 0.0
      %319 = vmatpush1.msra.mxu0 0.0
      %320 = vmatprep.subr.mxu0 0.0
      %321 = vmatpush1.msra.mxu0 0.0
      %322 = vmatprep.subr.mxu0 0.0
      %323 = vmatpush1.msra.mxu0 0.0
      %324 = vmatprep.subr.mxu0 0.0
      %325 = vmatpush1.msra.mxu0 0.0
      %326 = vmatprep.subr.mxu0 0.0
      %327 = vmatpush1.msra.mxu0 0.0
      %328 = vmatprep.subr.mxu0 0.0
      %329 = vmatpush1.msra.mxu0 0.0
      %330 = vmatprep.subr.mxu0 0.0
      %331 = vmatpush1.msra.mxu0 0.0
      %332 = vmatprep.subr.mxu0 0.0
      %333 = vmatpush1.msra.mxu0 0.0
      %334 = vmatprep.subr.mxu0 0.0
      %335 = vmatpush1.msra.mxu0 0.0
      %336 = vmatprep.subr.mxu0 0.0
      %337 = vmatpush1.msra.mxu0 0.0
      %338 = vmatprep.subr.mxu0 0.0
      %339 = vmatpush1.msra.mxu0 0.0
      %340 = vmatprep.subr.mxu0 0.0
      %341 = vmatpush1.msra.mxu0 0.0
      %342 = vmatprep.subr.mxu0 0.0
      %343 = vmatpush1.msra.mxu0 0.0
      %344 = vmatprep.subr.mxu0 0.0
      %345 = vmatpush1.msra.mxu0 0.0
      %346 = vmatprep.subr.mxu0 0.0
      %347 = vmatpush1.msra.mxu0 0.0
      %348 = vmatprep.subr.mxu0 0.0
      %349 = vmatpush1.msra.mxu0 0.0
      %350 = vmatprep.subr.mxu0 0.0
      %351 = vmatpush1.msra.mxu0 0.0
      %352 = vmatprep.subr.mxu0 0.0
      %353 = vmatpush1.msra.mxu0 0.0
      %354 = vmatprep.subr.mxu0 0.0
      %355 = vmatpush1.msra.mxu0 0.0
      %356 = vmatprep.subr.mxu0 0.0
      %357 = vmatpush1.msra.mxu0 0.0
      %358 = vmatprep.subr.mxu0 0.0
      %359 = vmatpush1.msra.mxu0 0.0
      %360 = vmatprep.subr.mxu0 0.0
      %361 = vmatpush1.msra.mxu0 0.0
      %362 = vmatprep.subr.mxu0 0.0
      %363 = vmatpush1.msra.mxu0 0.0
      %364 = vmatprep.mubr.f32.mxu0 0.0
      %365 = vmatmul.mubr.f32.gmra.mrb[0].mxu0 %v249
      %v366 = vpop.f32.mrb[0].mxu0
      %v367 = vadd.f32 0.0, %v366
      %v368 = vpop.f32.mrb[0].mxu0
      %369 = vmatprep.mubr.f32.mxu0 0.0
      %370 = vmatmul.mubr.f32.gmra.mrb[0].mxu0 %v252
      %v371 = vpop.f32.mrb[0].mxu0
      %v372 = vadd.f32 0.0, %v371
      %v373 = vpop.f32.mrb[0].mxu0
      %374 = vmatprep.mubr.f32.mxu0 0.0
      %375 = vmatmul.mubr.f32.gmra.mrb[0].mxu0 %v255
      %v376 = vpop.f32.mrb[0].mxu0
      %v377 = vadd.f32 0.0, %v376
      %v378 = vpop.f32.mrb[0].mxu0
      %379 = vmatprep.mubr.f32.mxu0 0.0
      %380 = vmatmul.mubr.f32.gmra.mrb[0].mxu0 %v258
      %v381 = vpop.f32.mrb[0].mxu0
      %v382 = vadd.f32 0.0, %v381
      %v383 = vpop.f32.mrb[0].mxu0
      %384 = vmatprep.mubr.f32.mxu0 0.0
      %385 = vmatmul.mubr.f32.gmra.mrb[0].mxu0 %v261
      %v386 = vpop.f32.mrb[0].mxu0
      %v387 = vadd.f32 0.0, %v386
      %v388 = vpop.f32.mrb[0].mxu0
      %389 = vmatprep.mubr.f32.mxu0 0.0
      %390 = vmatmul.mubr.f32.gmra.mrb[0].mxu0 %v264
      %v391 = vpop.f32.mrb[0].mxu0
      %v392 = vadd.f32 0.0, %v391
      %v393 = vpop.f32.mrb[0].mxu0
      %394 = vmatprep.mubr.f32.mxu0 0.0
      %395 = vmatmul.mubr.f32.gmra.mrb[0].mxu0 %v267
      %v396 = vpop.f32.mrb[0].mxu0
      %v397 = vadd.f32 0.0, %v396
      %v398 = vpop.f32.mrb[0].mxu0
      %399 = vmatprep.mubr.f32.mxu0 0.0
      %400 = vmatmul.mubr.f32.gmra.mrb[0].mxu0 %v270
      %v401 = vpop.f32.mrb[0].mxu0
      %v402 = vadd.f32 0.0, %v401
      %v403 = vpop.f32.mrb[0].mxu0
      %404 = vmatprep.mubr.f32.mxu0 0.0
      %405 = vmatmul.mubr.f32.gmra.mrb[0].mxu0 %v273
      %v406 = vpop.f32.mrb[0].mxu0
      %v407 = vadd.f32 0.0, %v406
      %v408 = vpop.f32.mrb[0].mxu0
      %409 = vmatprep.mubr.f32.mxu0 0.0
      %410 = vmatmul.mubr.f32.gmra.mrb[0].mxu0 %v276
      %v411 = vpop.f32.mrb[0].mxu0
      %v412 = vadd.f32 0.0, %v411
      %v413 = vpop.f32.mrb[0].mxu0
      %414 = vmatprep.mubr.f32.mxu0 0.0
      %415 = vmatmul.mubr.f32.gmra.mrb[0].mxu0 %v279
      %v416 = vpop.f32.mrb[0].mxu0
      %v417 = vadd.f32 0.0, %v416
      %v418 = vpop.f32.mrb[0].mxu0
      %419 = vmatprep.mubr.f32.mxu0 0.0
      %420 = vmatmul.mubr.f32.gmra.mrb[0].mxu0 %v282
      %v421 = vpop.f32.mrb[0].mxu0
      %v422 = vadd.f32 0.0, %v421
      %v423 = vpop.f32.mrb[0].mxu0
      %424 = vmatprep.mubr.f32.mxu0 0.0
      %425 = vmatmul.mubr.f32.gmra.mrb[0].mxu0 %v285
      %v426 = vpop.f32.mrb[0].mxu0
      %v427 = vadd.f32 0.0, %v426
      %v428 = vpop.f32.mrb[0].mxu0
      %429 = vmatprep.mubr.f32.mxu0 0.0
      %430 = vmatmul.mubr.f32.gmra.mrb[0].mxu0 %v288
      %v431 = vpop.f32.mrb[0].mxu0
      %v432 = vadd.f32 0.0, %v431
      %v433 = vpop.f32.mrb[0].mxu0
      %434 = vmatprep.mubr.f32.mxu0 0.0
      %435 = vmatmul.mubr.f32.gmra.mrb[0].mxu0 %v291
      %v436 = vpop.f32.mrb[0].mxu0
      %v437 = vadd.f32 0.0, %v436
      %v438 = vpop.f32.mrb[0].mxu0
      %439 = vmatprep.mubr.f32.mxu0 0.0
      %440 = vmatmul.mubr.f32.gmra.mrb[0].mxu0 %v294
      %v441 = vpop.f32.mrb[0].mxu0
      %v442 = vadd.f32 0.0, %v441
      %v443 = vpop.f32.mrb[0].mxu0
      %444 = vdwg.mxu0
      %445 = vst [vmem:[%s213] sm:$0xff] %v367
      %446 = vst [vmem:[%s213 + $0x8] sm:$0xff] %v372
      %447 = vst [vmem:[%s213 + $0x10] sm:$0xff] %v377
      %448 = vst [vmem:[%s213 + $0x18] sm:$0xff] %v382
      %449 = vst [vmem:[%s213 + $0x20] sm:$0xff] %v387
      %450 = vst [vmem:[%s213 + $0x28] sm:$0xff] %v392
      %451 = vst [vmem:[%s213 + $0x30] sm:$0xff] %v397
      %452 = vst [vmem:[%s213 + $0x38] sm:$0xff] %v402
      %453 = vst [vmem:[%s213 + $0x40] sm:$0xff] %v407
      %454 = vst [vmem:[%s213 + $0x48] sm:$0xff] %v412
      %455 = vst [vmem:[%s213 + $0x50] sm:$0xff] %v417
      %456 = vst [vmem:[%s213 + $0x58] sm:$0xff] %v422
      %457 = vst [vmem:[%s213 + $0x60] sm:$0xff] %v427
      %458 = vst [vmem:[%s213 + $0x68] sm:$0xff] %v432
      %459 = vst [vmem:[%s213 + $0x70] sm:$0xff] %v437
      %460 = vst [vmem:[%s213 + $0x78] sm:$0xff] %v442
      %v461 = vadd.f32 %v367, %v372
      %v462 = vadd.f32 %v461, %v377
      %v463 = vadd.f32 %v462, %v382
      %v464 = vadd.f32 %v463, %v387
      %v465 = vadd.f32 %v464, %v392
      %v466 = vadd.f32 %v465, %v397
      %v467 = vadd.f32 %v466, %v402
      %v468 = vadd.f32 %v467, %v407
      %v469 = vadd.f32 %v468, %v412
      %v470 = vadd.f32 %v469, %v417
      %v471 = vadd.f32 %v470, %v422
      %v472 = vadd.f32 %v471, %v427
      %v473 = vadd.f32 %v472, %v432
      %v474 = vadd.f32 %v473, %v437
      %v475 = vadd.f32 %v474, %v442
      %v476 = vrot.slane %v475, 4
      %v477 = vadd.f32 %v475, %v476
      %v478 = vrot.slane %v477, 2
      %v479 = vadd.f32 %v477, %v478
      %v480 = vrot.slane %v479, 1
      %v481 = vadd.f32 %v479, %v480
      %v482 = vmul.f32 %v367, %v367
      %v483 = vmul.f32 %v372, %v372
      %v484 = vmul.f32 %v377, %v377
      %v485 = vmul.f32 %v382, %v382
      %v486 = vmul.f32 %v387, %v387
      %v487 = vmul.f32 %v392, %v392
      %v488 = vmul.f32 %v397, %v397
      %v489 = vmul.f32 %v402, %v402
      %v490 = vmul.f32 %v407, %v407
      %v491 = vmul.f32 %v412, %v412
      %v492 = vmul.f32 %v417, %v417
      %v493 = vmul.f32 %v422, %v422
      %v494 = vmul.f32 %v427, %v427
      %v495 = vmul.f32 %v432, %v432
      %v496 = vmul.f32 %v437, %v437
      %v497 = vmul.f32 %v442, %v442
      %v498 = vadd.f32 %v482, %v483
      %v499 = vadd.f32 %v498, %v484
      %v500 = vadd.f32 %v499, %v485
      %v501 = vadd.f32 %v500, %v486
      %v502 = vadd.f32 %v501, %v487
      %v503 = vadd.f32 %v502, %v488
      %v504 = vadd.f32 %v503, %v489
      %v505 = vadd.f32 %v504, %v490
      %v506 = vadd.f32 %v505, %v491
      %v507 = vadd.f32 %v506, %v492
      %v508 = vadd.f32 %v507, %v493
      %v509 = vadd.f32 %v508, %v494
      %v510 = vadd.f32 %v509, %v495
      %v511 = vadd.f32 %v510, %v496
      %v512 = vadd.f32 %v511, %v497
      %v513 = vrot.slane %v512, 4
      %v514 = vadd.f32 %v512, %v513
      %v515 = vrot.slane %v514, 2
      %v516 = vadd.f32 %v514, %v515
      %v517 = vrot.slane %v516, 1
      %v518 = vadd.f32 %v516, %v517
      %v519 = vld [vmem:[%s220] sm:$0x3]
      %vm520 = vcmask 1040384
      %v521 = vsel %vm520, %v481, %v518
      %v522 = vadd.f32 %v519, %v521
      %523 = vst [vmem:[%s220] sm:$0x3] %v522
      %s524 = smul.u32 %s19, 2
      %s525 = sadd.s32 %s524, %s20
      %s526 = smul.u32 16, %s525
      %p527 = scmp.lt.s32.totalorder %s526, 63
      %s528 = scalar_select %p527, %s526, 63
      %s529 = smul.addr %s528, 8
      %s530 = scalar_lea.vmem %s2, %s529
      %p531 = scmp.lt.s32.totalorder %s19, 1
      %s532 = scalar_select %p531, %s19, 1
      %s533 = smul.addr %s532, 2
      %s534 = scalar_lea.vmem %s3, %s533
      // Predicated region
      $region33: #{conv_bn_relu_pallas.1} parent=27 // pred_check
        %p535 = pneg %p100
      $region34: #{conv_bn_relu_pallas.1} parent=27 // pred_check_branch
        %537 = sbr.rel (%p535) target = $region36
      $region35: #{conv_bn_relu_pallas.1} parent=27 // pred_region
        %s538 = smul.u32 %s19, 2
        %s539 = sadd.s32 %s538, %s20
        %s540 = smul.u32 16, %s539
      $region36: #{conv_bn_relu_pallas.1} parent=27 // pred_fallthru
        _
      // Predicated region
      $region37: #{conv_bn_relu_pallas.1} parent=27 // pred_check
        %p541 = pneg %p126
      $region38: #{conv_bn_relu_pallas.1} parent=27 // pred_check_branch
        %543 = sbr.rel (%p541) target = $region40
      $region39: #{conv_bn_relu_pallas.1} parent=27 // pred_region
        _
      $region40: #{conv_bn_relu_pallas.1} parent=27 // pred_fallthru
        _
    $region28: #{conv_bn_relu_pallas.1} parent=5 // pred_fallthru
      _
    %p544 = scmp.le.s32.totalorder 2, %s10
    // Predicated region
    $region41: #{conv_bn_relu_pallas.1} parent=5 // pred_check
      %p545 = pneg %p544
    $region42: #{conv_bn_relu_pallas.1} parent=5 // pred_check_branch
      %547 = sbr.rel (%p545) target = $region44
    $region43: #{conv_bn_relu_pallas.1} parent=5 // pred_region
      %s548 = ssub.s32 %s10, 2
      // Predicated region
      $region45: #{conv_bn_relu_pallas.1} parent=43 // pred_check
        %p549 = pneg %p106
      $region46: #{conv_bn_relu_pallas.1} parent=43 // pred_check_branch
        %551 = sbr.rel (%p549) target = $region48
      $region47: #{conv_bn_relu_pallas.1} parent=43 // pred_region
        %s552 = smul.u32 %s21, 2
        %s553 = sadd.s32 %s552, %s22
        %s554 = smul.u32 16, %s553
        %p555 = scmp.lt.s32.totalorder %s554, 63
        %s556 = scalar_select %p555, %s554, 63
        %s557 = smul.addr %s556, 8
        %s558 = scalar_lea.vmem %s2, %s557
      $region48: #{conv_bn_relu_pallas.1} parent=43 // pred_fallthru
        _
      // Predicated region
      $region49: #{conv_bn_relu_pallas.1} parent=43 // pred_check
        %p559 = pneg %p132
      $region50: #{conv_bn_relu_pallas.1} parent=43 // pred_check_branch
        %561 = sbr.rel (%p559) target = $region52
      $region51: #{conv_bn_relu_pallas.1} parent=43 // pred_region
        %p562 = scmp.lt.s32.totalorder %s21, 1
        %s563 = scalar_select %p562, %s21, 1
        %s564 = smul.addr %s563, 2
        %s565 = scalar_lea.vmem %s3, %s564
      $region52: #{conv_bn_relu_pallas.1} parent=43 // pred_fallthru
        _
    $region44: #{conv_bn_relu_pallas.1} parent=5 // pred_fallthru
      _
  $region6: #{conv_bn_relu_pallas.1} parent=0 // loop_footer
    %s14 = sadd.s32 1, %s10
  $region7: #{conv_bn_relu_pallas.1} parent=0 // loop_footer_branch
    %9 = sbr.rel target = $region3
  $region8: #{conv_bn_relu_pallas.1} parent=0 // loop_exit
    _

</llo_original>
